<compile_context>
chip_gen: v6e
topology: v6e:2x2x1
jax: 0.10.0
libtpu: 0.0.40
codegen_flags: <defaults>
</compile_context>

<pallas_src>
import functools

import jax
import jax.numpy as jnp
from jax.experimental import pallas as pl
from jax.experimental.pallas import tpu as pltpu


def _round_up(x, m):
    return (x + m - 1) // m * m


def conditioner2_kernel(x_ref, w1_ref, b1_ref, w2_ref, b2_ref, out_ref):
    # fc1 (MXU, f32 accumulation)
    h = jnp.dot(x_ref[...], w1_ref[...], preferred_element_type=jnp.float32)
    # bias + ReLU in f32 (VPU filler under an MXU-bound schedule)
    h = jnp.maximum(h + b1_ref[...], 0.0)
    # fc2 (cast activations to the weight dtype only at the MXU input)
    o = jnp.dot(h.astype(w2_ref.dtype), w2_ref[...], preferred_element_type=jnp.float32)
    o = o + b2_ref[...]
    # Single unmasked lane-dense store; chunk(2) happens in the wrapper.
    out_ref[...] = o.astype(out_ref.dtype)


@functools.partial(jax.jit, static_argnames=("block_batch",))
def conditioner2_forward(x, w1, b1, w2, b2, *, block_batch=512):
    """x: [B, input_size]; w1: [input_size, hidden]; b1: [hidden];
    w2: [hidden, output_size]; b2: [output_size].
    Returns (out[..., :output_size//2], out[..., output_size//2:]),
    matching torch's fc1 -> ReLU -> fc2 -> chunk(2, dim=-1)."""
    B, input_size = x.shape
    hidden_size = w1.shape[1]
    output_size = w2.shape[1]
    assert output_size % 2 == 0, "chunk(2) requires even output_size"
    half = output_size // 2

    # Pad feature dims to lane multiples (128). Zero padding is inert:
    #   fc1: extra input cols have zero weights; extra hidden cols get bias 0 ->
    #        relu(0)=0; fc2: extra hidden rows are zero, extra output cols are
    #        zero-weight/zero-bias and get sliced off below.
    in_pad = _round_up(input_size, 128)
    hid_pad = _round_up(hidden_size, 128)
    out_pad = _round_up(output_size, 128)

    x_p = jnp.pad(x, ((0, 0), (0, in_pad - input_size)))
    w1_p = jnp.pad(w1, ((0, in_pad - input_size), (0, hid_pad - hidden_size)))
    b1_p = jnp.pad(b1, ((0, hid_pad - hidden_size),)).reshape(1, hid_pad)
    w2_p = jnp.pad(w2, ((0, hid_pad - hidden_size), (0, out_pad - output_size)))
    b2_p = jnp.pad(b2, ((0, out_pad - output_size),)).reshape(1, out_pad)

    # Batch tile: multiple of 8 (sublane), capped at block_batch; pad B up to it.
    block_batch = max(8, _round_up(block_batch, 8))
    tb = min(_round_up(B, 8), block_batch)
    b_padded = _round_up(B, tb)
    if b_padded != B:
        x_p = jnp.pad(x_p, ((0, b_padded - B), (0, 0)))
    grid = (b_padded // tb,)

    # VMEM budget: resident weights/biases + double-buffered x/out tiles + f32
    # intermediates, with 2x margin, capped below v7x's 64 MiB physical VMEM.
    itemsize = jnp.dtype(x.dtype).itemsize
    resident = (in_pad * hid_pad * jnp.dtype(w1.dtype).itemsize
                + hid_pad * out_pad * jnp.dtype(w2.dtype).itemsize
                + (hid_pad + out_pad) * 4)
    per_step = 2 * tb * (in_pad + out_pad) * itemsize + 2 * tb * (hid_pad + out_pad) * 4
    vmem_limit = int(min(max(2 * (resident + per_step), 4 << 20), 48 << 20))

    # TODO(synk): for very large hidden/output sizes, add K/N grid axes with an
    # f32 VMEM accumulator (pl.when init/finalize); unnecessary at these sizes.
    out = pl.pallas_call(
        conditioner2_kernel,
        out_shape=jax.ShapeDtypeStruct((b_padded, out_pad), x.dtype),
        grid_spec=pltpu.PrefetchScalarGridSpec(
            num_scalar_prefetch=0,
            grid=grid,
            in_specs=[
                pl.BlockSpec((tb, in_pad), lambda i: (i, 0)),        # x tile (pipelined)
                pl.BlockSpec((in_pad, hid_pad), lambda i: (0, 0)),   # w1 resident
                pl.BlockSpec((1, hid_pad), lambda i: (0, 0)),        # b1 resident
                pl.BlockSpec((hid_pad, out_pad), lambda i: (0, 0)),  # w2 resident
                pl.BlockSpec((1, out_pad), lambda i: (0, 0)),        # b2 resident
            ],
            out_specs=pl.BlockSpec((tb, out_pad), lambda i: (i, 0)),  # lane-dense out
        ),
        compiler_params=pltpu.CompilerParams(
            dimension_semantics=("parallel",),
            vmem_limit_bytes=vmem_limit,
        ),
    )(x_p, w1_p, b1_p, w2_p, b2_p)

    out = out[:B, :output_size]
    return out[:, :half], out[:, half:]


if __name__ == "__main__":
    # Small shapes consistent with the module: Linear(in, hidden) -> Linear(hidden, out).
    # batch=20 with block_batch=8 exercises the grid (3 steps) and batch padding.
    batch = 20
    input_size = 16
    hidden_size = 32
    output_size = 64  # even -> chunk(2) gives two [batch, 32] tensors

    key = jax.random.PRNGKey(0)
    kx, kw1, kb1, kw2, kb2 = jax.random.split(key, 5)

    x = jax.random.normal(kx, (batch, input_size), dtype=jnp.float32)
    # Parameters stored as [in, out] so the kernel computes x @ W + b.
    w1 = jax.random.normal(kw1, (input_size, hidden_size), dtype=jnp.float32) * 0.1
    b1 = jax.random.normal(kb1, (hidden_size,), dtype=jnp.float32) * 0.1
    w2 = jax.random.normal(kw2, (hidden_size, output_size), dtype=jnp.float32) * 0.1
    b2 = jax.random.normal(kb2, (output_size,), dtype=jnp.float32) * 0.1

    out1, out2 = conditioner2_forward(x, w1, b1, w2, b2, block_batch=8)
    jax.block_until_ready((out1, out2))

    # Reference check in plain JAX (same semantics as the PyTorch module).
    h_ref = jnp.maximum(x @ w1 + b1, 0.0)
    o_ref = h_ref @ w2 + b2
    ref1, ref2 = o_ref[:, : output_size // 2], o_ref[:, output_size // 2:]
    assert out1.shape == (batch, output_size // 2) and out2.shape == (batch, output_size // 2)
    assert jnp.allclose(out1, ref1, atol=1e-5, rtol=1e-5)
    assert jnp.allclose(out2, ref2, atol=1e-5, rtol=1e-5)

    print("KERNEL_OK")
</pallas_src>

<mosaic_0001>
module attributes {stable_mosaic.version = 11 : i64} {
  func.func @conditioner2_kernel(%arg0: i32, %arg1: memref<8x128xf32, #tpu.memory_space<vmem>>, %arg2: memref<128x128xf32, #tpu.memory_space<vmem>>, %arg3: memref<1x128xf32, #tpu.memory_space<vmem>>, %arg4: memref<128x128xf32, #tpu.memory_space<vmem>>, %arg5: memref<1x128xf32, #tpu.memory_space<vmem>>, %arg6: memref<8x128xf32, #tpu.memory_space<vmem>>) attributes {dimension_semantics = [#tpu.dimension_semantics<parallel>], iteration_bounds = array<i64: 3>, scalar_prefetch = 0 : i64, scratch_operands = 0 : i64, tpu.core_type = #tpu.core_type<tc>, window_params = [{transform_indices = @transform_0, window_bounds = array<i64: 8, 128>}, {pipeline_mode = #tpu.pipeline_mode<synchronous>, transform_indices = @transform_1, window_bounds = array<i64: 128, 128>}, {pipeline_mode = #tpu.pipeline_mode<synchronous>, transform_indices = @transform_2, window_bounds = array<i64: 1, 128>}, {pipeline_mode = #tpu.pipeline_mode<synchronous>, transform_indices = @transform_3, window_bounds = array<i64: 128, 128>}, {pipeline_mode = #tpu.pipeline_mode<synchronous>, transform_indices = @transform_4, window_bounds = array<i64: 1, 128>}, {transform_indices = @transform_5, window_bounds = array<i64: 8, 128>}]} {
    %c0 = arith.constant 0 : index
    %c0_0 = arith.constant 0 : index
    %0 = vector.load %arg1[%c0, %c0_0] : memref<8x128xf32, #tpu.memory_space<vmem>>, vector<8x128xf32>
    %c0_1 = arith.constant 0 : index
    %c0_2 = arith.constant 0 : index
    %1 = vector.load %arg2[%c0_1, %c0_2] : memref<128x128xf32, #tpu.memory_space<vmem>>, vector<128x128xf32>
    %cst = arith.constant dense<0.000000e+00> : vector<8x128xf32>
    %2 = tpu.matmul %0, %1, %cst {dimension_numbers = #tpu.dot_dimension_numbers<[1], [0], [0], [1], [0, 0, 1, 1], [], []>} : vector<8x128xf32>, vector<128x128xf32>, vector<8x128xf32> -> vector<8x128xf32>
    %c0_3 = arith.constant 0 : index
    %c0_4 = arith.constant 0 : index
    %3 = vector.load %arg3[%c0_3, %c0_4] : memref<1x128xf32, #tpu.memory_space<vmem>>, vector<1x128xf32>
    %4 = vector.broadcast %3 : vector<1x128xf32> to vector<8x128xf32>
    %5 = arith.addf %2, %4 : vector<8x128xf32>
    %cst_5 = arith.constant 0.000000e+00 : f32
    %6 = vector.broadcast %cst_5 : f32 to vector<8x128xf32>
    %7 = arith.maximumf %5, %6 : vector<8x128xf32>
    %c0_6 = arith.constant 0 : index
    %c0_7 = arith.constant 0 : index
    %8 = vector.load %arg4[%c0_6, %c0_7] : memref<128x128xf32, #tpu.memory_space<vmem>>, vector<128x128xf32>
    %cst_8 = arith.constant dense<0.000000e+00> : vector<8x128xf32>
    %9 = tpu.matmul %7, %8, %cst_8 {dimension_numbers = #tpu.dot_dimension_numbers<[1], [0], [0], [1], [0, 0, 1, 1], [], []>} : vector<8x128xf32>, vector<128x128xf32>, vector<8x128xf32> -> vector<8x128xf32>
    %c0_9 = arith.constant 0 : index
    %c0_10 = arith.constant 0 : index
    %10 = vector.load %arg5[%c0_9, %c0_10] : memref<1x128xf32, #tpu.memory_space<vmem>>, vector<1x128xf32>
    %11 = vector.broadcast %10 : vector<1x128xf32> to vector<8x128xf32>
    %12 = arith.addf %9, %11 : vector<8x128xf32>
    %c0_11 = arith.constant 0 : index
    %c0_12 = arith.constant 0 : index
    %13 = vector.load %arg6[%c0_11, %c0_12] : memref<8x128xf32, #tpu.memory_space<vmem>>, vector<8x128xf32>
    tpu.vector_store %arg6[%c0_11, %c0_12], %12 {strides = array<i32>} : memref<8x128xf32, #tpu.memory_space<vmem>>, vector<8x128xf32>,
    return
  }
  func.func @transform_0(%arg0: i32) -> (i32, i32) {
    %c0_i32 = arith.constant 0 : i32
    %c0_i32_0 = arith.constant 0 : i32
    return %arg0, %c0_i32 : i32, i32
  }
  func.func @transform_1(%arg0: i32) -> (i32, i32) {
    %c0_i32 = arith.constant 0 : i32
    %c0_i32_0 = arith.constant 0 : i32
    %c0_i32_1 = arith.constant 0 : i32
    return %c0_i32, %c0_i32_0 : i32, i32
  }
  func.func @transform_2(%arg0: i32) -> (i32, i32) {
    %c0_i32 = arith.constant 0 : i32
    %c0_i32_0 = arith.constant 0 : i32
    %c0_i32_1 = arith.constant 0 : i32
    return %c0_i32, %c0_i32_0 : i32, i32
  }
  func.func @transform_3(%arg0: i32) -> (i32, i32) {
    %c0_i32 = arith.constant 0 : i32
    %c0_i32_0 = arith.constant 0 : i32
    %c0_i32_1 = arith.constant 0 : i32
    return %c0_i32, %c0_i32_0 : i32, i32
  }
  func.func @transform_4(%arg0: i32) -> (i32, i32) {
    %c0_i32 = arith.constant 0 : i32
    %c0_i32_0 = arith.constant 0 : i32
    %c0_i32_1 = arith.constant 0 : i32
    return %c0_i32, %c0_i32_0 : i32, i32
  }
  func.func @transform_5(%arg0: i32) -> (i32, i32) {
    %c0_i32 = arith.constant 0 : i32
    %c0_i32_0 = arith.constant 0 : i32
    return %arg0, %c0_i32 : i32, i32
  }
}

</mosaic_0001>

<llo_original>
// kernel: conditioner2_forward.1
$region0: #{conditioner2_forward.1}
  #allocation0 [shape = 'u32[]', space=smem, size = 0x4, offset = 0x4, fixed_abs, tag = 'smem constant byte address 0x4 - core index']
  #allocation1 [shape = 'u32[144,128]{1,0:T(1,128)}', space=vmem, size = 0x12000, scoped, tag = 'internal scratch']
  %s0 = inlined_call_operand.vmem [shape: f32[24,128], index: 0, kind: input, shape index: {}]
  %s1 = inlined_call_operand.vmem [shape: f32[128,128], index: 1, kind: input, shape index: {}]
  %s2 = inlined_call_operand.vmem [shape: f32[1,128], index: 2, kind: input, shape index: {}]
  %s3 = inlined_call_operand.vmem [shape: f32[128,128], index: 3, kind: input, shape index: {}]
  %s4 = inlined_call_operand.vmem [shape: f32[1,128], index: 4, kind: input, shape index: {}]
  %s5 = inlined_call_operand.vmem [shape: f32[24,128], index: 5, kind: output, shape index: {}]
  %s6 = sld [smem:[#allocation0]]
  $region53: #{conditioner2_forward.1} parent=0
    _
  %s8 = ssub.s32 1, %s6
  %s9 = scalar_select 0, %s8, %s6
  loop: start=0, step=1, limit=5
  $region2: #{conditioner2_forward.1} parent=0 // loop_pre_header
    _
  $region3: #{conditioner2_forward.1} parent=0 // loop_header
    %s11 = sphi 0, %s15
    %p12 = scmp.ge.s32.totalorder %s11, 5
    %s21 = sphi 0, %s23
    %s24 = sphi 0, %s21
    %s25 = sphi 0, %s24
    %s41 = sphi 0, %s25
    %s45 = sphi 0, %s45
    %s47 = sphi 0, %s45
    %s48 = sphi 0, %s47
    %s62 = sphi 0, %s48
    %s66 = sphi 0, %s66
    %s68 = sphi 0, %s66
    %s69 = sphi 0, %s68
    %s83 = sphi 0, %s69
    %s87 = sphi 0, %s87
    %s89 = sphi 0, %s87
    %s90 = sphi 0, %s89
    %s104 = sphi 0, %s90
    %s108 = sphi 0, %s108
    %s110 = sphi 0, %s108
    %s111 = sphi 0, %s110
    %s125 = sphi 0, %s111
    %s131 = sphi 0, %s133
    %s134 = sphi 0, %s131
    %s135 = sphi 0, %s134
    %s151 = sphi 0, %s135
  $region4: #{conditioner2_forward.1} parent=0 // loop_header_branch
    %14 = sbr.rel (%p12) target = $region8
  $region5: #{conditioner2_forward.1} parent=0 // loop_body
    %s16 = ssub.s32 %s11, 1
    %s17 = ssub.s32 %s11, 2
    %s18 = sadd.s32 %s11, 1
    %s19 = ssub.s32 %s11, %s18
    %p20 = scmp.eq.s32.totalorder %s19, 0
    %s22 = sadd.s32 %s21, 1
    %s23 = scalar_select %p20, %s21, %s22
    %p26 = pneg %p20
    %p27 = scmp.eq.s32.totalorder %s11, 2
    %p28 = por %p26, %p27
    %p29 = scmp.ne.s32.totalorder %s21, %s24
    %p30 = scmp.eq.s32.totalorder %s11, 0
    %p31 = por %p29, %p30
    %p32 = scmp.ne.s32.totalorder %s21, %s24
    %p33 = scmp.eq.s32.totalorder %s16, 2
    %p34 = por %p32, %p33
    %p35 = scmp.ne.s32.totalorder %s24, %s25
    %p36 = scmp.eq.s32.totalorder %s16, 0
    %p37 = por %p35, %p36
    %p38 = scmp.ne.s32.totalorder %s24, %s25
    %p39 = scmp.eq.s32.totalorder %s17, 2
    %p40 = por %p38, %p39
    %p42 = scmp.ne.s32.totalorder %s25, %s41
    %p43 = scmp.eq.s32.totalorder %s17, 0
    %p44 = por %p42, %p43
    %s46 = sadd.s32 %s45, 1
    %p49 = scmp.eq.s32.totalorder %s11, 2
    %p50 = scmp.ne.s32.totalorder %s45, %s47
    %p51 = scmp.eq.s32.totalorder %s11, 0
    %p52 = por %p50, %p51
    %p53 = scmp.ne.s32.totalorder %s45, %s47
    %p54 = scmp.eq.s32.totalorder %s16, 2
    %p55 = por %p53, %p54
    %p56 = scmp.ne.s32.totalorder %s47, %s48
    %p57 = scmp.eq.s32.totalorder %s16, 0
    %p58 = por %p56, %p57
    %p59 = scmp.ne.s32.totalorder %s47, %s48
    %p60 = scmp.eq.s32.totalorder %s17, 2
    %p61 = por %p59, %p60
    %p63 = scmp.ne.s32.totalorder %s48, %s62
    %p64 = scmp.eq.s32.totalorder %s17, 0
    %p65 = por %p63, %p64
    %s67 = sadd.s32 %s66, 1
    %p70 = scmp.eq.s32.totalorder %s11, 2
    %p71 = scmp.ne.s32.totalorder %s66, %s68
    %p72 = scmp.eq.s32.totalorder %s11, 0
    %p73 = por %p71, %p72
    %p74 = scmp.ne.s32.totalorder %s66, %s68
    %p75 = scmp.eq.s32.totalorder %s16, 2
    %p76 = por %p74, %p75
    %p77 = scmp.ne.s32.totalorder %s68, %s69
    %p78 = scmp.eq.s32.totalorder %s16, 0
    %p79 = por %p77, %p78
    %p80 = scmp.ne.s32.totalorder %s68, %s69
    %p81 = scmp.eq.s32.totalorder %s17, 2
    %p82 = por %p80, %p81
    %p84 = scmp.ne.s32.totalorder %s69, %s83
    %p85 = scmp.eq.s32.totalorder %s17, 0
    %p86 = por %p84, %p85
    %s88 = sadd.s32 %s87, 1
    %p91 = scmp.eq.s32.totalorder %s11, 2
    %p92 = scmp.ne.s32.totalorder %s87, %s89
    %p93 = scmp.eq.s32.totalorder %s11, 0
    %p94 = por %p92, %p93
    %p95 = scmp.ne.s32.totalorder %s87, %s89
    %p96 = scmp.eq.s32.totalorder %s16, 2
    %p97 = por %p95, %p96
    %p98 = scmp.ne.s32.totalorder %s89, %s90
    %p99 = scmp.eq.s32.totalorder %s16, 0
    %p100 = por %p98, %p99
    %p101 = scmp.ne.s32.totalorder %s89, %s90
    %p102 = scmp.eq.s32.totalorder %s17, 2
    %p103 = por %p101, %p102
    %p105 = scmp.ne.s32.totalorder %s90, %s104
    %p106 = scmp.eq.s32.totalorder %s17, 0
    %p107 = por %p105, %p106
    %s109 = sadd.s32 %s108, 1
    %p112 = scmp.eq.s32.totalorder %s11, 2
    %p113 = scmp.ne.s32.totalorder %s108, %s110
    %p114 = scmp.eq.s32.totalorder %s11, 0
    %p115 = por %p113, %p114
    %p116 = scmp.ne.s32.totalorder %s108, %s110
    %p117 = scmp.eq.s32.totalorder %s16, 2
    %p118 = por %p116, %p117
    %p119 = scmp.ne.s32.totalorder %s110, %s111
    %p120 = scmp.eq.s32.totalorder %s16, 0
    %p121 = por %p119, %p120
    %p122 = scmp.ne.s32.totalorder %s110, %s111
    %p123 = scmp.eq.s32.totalorder %s17, 2
    %p124 = por %p122, %p123
    %p126 = scmp.ne.s32.totalorder %s111, %s125
    %p127 = scmp.eq.s32.totalorder %s17, 0
    %p128 = por %p126, %p127
    %s129 = ssub.s32 %s11, %s18
    %p130 = scmp.eq.s32.totalorder %s129, 0
    %s132 = sadd.s32 %s131, 1
    %s133 = scalar_select %p130, %s131, %s132
    %p136 = pneg %p130
    %p137 = scmp.eq.s32.totalorder %s11, 2
    %p138 = por %p136, %p137
    %p139 = scmp.ne.s32.totalorder %s131, %s134
    %p140 = scmp.eq.s32.totalorder %s11, 0
    %p141 = por %p139, %p140
    %p142 = scmp.ne.s32.totalorder %s131, %s134
    %p143 = scmp.eq.s32.totalorder %s16, 2
    %p144 = por %p142, %p143
    %p145 = scmp.ne.s32.totalorder %s134, %s135
    %p146 = scmp.eq.s32.totalorder %s16, 0
    %p147 = por %p145, %p146
    %p148 = scmp.ne.s32.totalorder %s134, %s135
    %p149 = scmp.eq.s32.totalorder %s17, 2
    %p150 = por %p148, %p149
    %p152 = scmp.ne.s32.totalorder %s135, %s151
    %p153 = scmp.eq.s32.totalorder %s17, 0
    %p154 = por %p152, %p153
    %p155 = scmp.le.s32.totalorder 1, %s11
    %p156 = scmp.lt.s32.totalorder %s11, 4
    %p157 = pnand %p155, %p156
    %p158 = pneg %p157
    // Predicated region
    $region9: #{conditioner2_forward.1} parent=5 // pred_check
      _
    $region10: #{conditioner2_forward.1} parent=5 // pred_check_branch
      %160 = sbr.rel (%p157) target = $region12
    $region11: #{conditioner2_forward.1} parent=5 // pred_region
      %s161 = ssub.s32 %s11, 1
      // Predicated region
      $region13: #{conditioner2_forward.1} parent=11 // pred_check
        %p162 = pneg %p58
      $region14: #{conditioner2_forward.1} parent=11 // pred_check_branch
        %164 = sbr.rel (%p162) target = $region16
      $region15: #{conditioner2_forward.1} parent=11 // pred_region
        _
      $region16: #{conditioner2_forward.1} parent=11 // pred_fallthru
        _
      // Predicated region
      $region17: #{conditioner2_forward.1} parent=11 // pred_check
        %p165 = pneg %p79
      $region18: #{conditioner2_forward.1} parent=11 // pred_check_branch
        %167 = sbr.rel (%p165) target = $region20
      $region19: #{conditioner2_forward.1} parent=11 // pred_region
        _
      $region20: #{conditioner2_forward.1} parent=11 // pred_fallthru
        _
      // Predicated region
      $region21: #{conditioner2_forward.1} parent=11 // pred_check
        %p168 = pneg %p100
      $region22: #{conditioner2_forward.1} parent=11 // pred_check_branch
        %170 = sbr.rel (%p168) target = $region24
      $region23: #{conditioner2_forward.1} parent=11 // pred_region
        _
      $region24: #{conditioner2_forward.1} parent=11 // pred_fallthru
        _
      // Predicated region
      $region25: #{conditioner2_forward.1} parent=11 // pred_check
        %p171 = pneg %p121
      $region26: #{conditioner2_forward.1} parent=11 // pred_check_branch
        %173 = sbr.rel (%p171) target = $region28
      $region27: #{conditioner2_forward.1} parent=11 // pred_region
        _
      $region28: #{conditioner2_forward.1} parent=11 // pred_fallthru
        _
    $region12: #{conditioner2_forward.1} parent=5 // pred_fallthru
      _
    %p174 = scmp.lt.s32.totalorder %s11, 3
    // Predicated region
    $region29: #{conditioner2_forward.1} parent=5 // pred_check
      %p175 = pneg %p174
    $region30: #{conditioner2_forward.1} parent=5 // pred_check_branch
      %177 = sbr.rel (%p175) target = $region32
    $region31: #{conditioner2_forward.1} parent=5 // pred_region
      // Predicated region
      $region33: #{conditioner2_forward.1} parent=31 // pred_check
        %p178 = pneg %p31
      $region34: #{conditioner2_forward.1} parent=31 // pred_check_branch
        %180 = sbr.rel (%p178) target = $region36
      $region35: #{conditioner2_forward.1} parent=31 // pred_region
        %p181 = scmp.lt.s32.totalorder %s11, 2
        %s182 = scalar_select %p181, %s11, 2
        %s183 = smul.addr %s182, 8
        %s184 = scalar_lea.vmem %s0, %s183
      $region36: #{conditioner2_forward.1} parent=31 // pred_fallthru
        _
    $region32: #{conditioner2_forward.1} parent=5 // pred_fallthru
      _
    %p185 = scmp.le.s32.totalorder 1, %s11
    %p186 = scmp.lt.s32.totalorder %s11, 4
    %p187 = pnand %p185, %p186
    %p188 = pneg %p187
    // Predicated region
    $region37: #{conditioner2_forward.1} parent=5 // pred_check
      _
    $region38: #{conditioner2_forward.1} parent=5 // pred_check_branch
      %190 = sbr.rel (%p187) target = $region40
    $region39: #{conditioner2_forward.1} parent=5 // pred_region
      %s191 = ssub.s32 %s11, 1
      %p192 = scmp.lt.s32.totalorder %s16, 2
      %s193 = scalar_select %p192, %s16, 2
      %s194 = smul.addr %s193, 8
      %s195 = scalar_lea.vmem %s0, %s194
      %p196 = pneg %p37
      %p197 = pneg %p34
      %p198 = pneg %p58
      %p199 = pneg %p55
      %p200 = pneg %p79
      %p201 = pneg %p76
      %p202 = pneg %p100
      %p203 = pneg %p97
      %p204 = pneg %p121
      %p205 = pneg %p118
      %p206 = pneg %p147
      %p207 = pneg %p144
      %p208 = scmp.lt.s32.totalorder %s16, 2
      %s209 = scalar_select %p208, %s16, 2
      %s210 = smul.addr %s209, 8
      %s211 = scalar_lea.vmem %s5, %s210
      %p212 = scmp.lt.s32.totalorder %s16, 2
      %s213 = scalar_select %p212, %s16, 2
      %s214 = smul.addr %s213, 8
      %s215 = scalar_lea.vmem %s0, %s214
      %p216 = scmp.lt.s32.totalorder %s16, 2
      %s217 = scalar_select %p216, %s16, 2
      %s218 = smul.addr %s217, 8
      %s219 = scalar_lea.vmem %s5, %s218
      %v220 = vld [vmem:[%s215] sm:$0xff]
      %v221 = vld [vmem:[%s1] sm:$0xff]
      %v222 = vld [vmem:[%s1 + $0x8] sm:$0xff]
      %v223 = vld [vmem:[%s1 + $0x10] sm:$0xff]
      %v224 = vld [vmem:[%s1 + $0x18] sm:$0xff]
      %v225 = vld [vmem:[%s1 + $0x20] sm:$0xff]
      %v226 = vld [vmem:[%s1 + $0x28] sm:$0xff]
      %v227 = vld [vmem:[%s1 + $0x30] sm:$0xff]
      %v228 = vld [vmem:[%s1 + $0x38] sm:$0xff]
      %v229 = vld [vmem:[%s1 + $0x40] sm:$0xff]
      %v230 = vld [vmem:[%s1 + $0x48] sm:$0xff]
      %v231 = vld [vmem:[%s1 + $0x50] sm:$0xff]
      %v232 = vld [vmem:[%s1 + $0x58] sm:$0xff]
      %v233 = vld [vmem:[%s1 + $0x60] sm:$0xff]
      %v234 = vld [vmem:[%s1 + $0x68] sm:$0xff]
      %v235 = vld [vmem:[%s1 + $0x70] sm:$0xff]
      %v236 = vld [vmem:[%s1 + $0x78] sm:$0xff]
      %v237 = vld [vmem:[%s2] sm:$0x1]
      %v239 = vlaneseq
      %v240 = vshrl.u32 %v239, 7
      %v241 = vsub.s32 0, %v240
      %v242 = vrot.slane %v237, %v241
      %244 = vmatprep.subr.mxu0 0.0
      %245 = vmatpush1.msra.mxu0 %v236
      %246 = vmatprep.subr.mxu0 0.0
      %247 = vmatpush1.msra.mxu0 %v235
      %248 = vmatprep.subr.mxu0 0.0
      %249 = vmatpush1.msra.mxu0 %v234
      %250 = vmatprep.subr.mxu0 0.0
      %251 = vmatpush1.msra.mxu0 %v233
      %252 = vmatprep.subr.mxu0 0.0
      %253 = vmatpush1.msra.mxu0 %v232
      %254 = vmatprep.subr.mxu0 0.0
      %255 = vmatpush1.msra.mxu0 %v231
      %256 = vmatprep.subr.mxu0 0.0
      %257 = vmatpush1.msra.mxu0 %v230
      %258 = vmatprep.subr.mxu0 0.0
      %259 = vmatpush1.msra.mxu0 %v229
      %260 = vmatprep.subr.mxu0 0.0
      %261 = vmatpush1.msra.mxu0 %v228
      %262 = vmatprep.subr.mxu0 0.0
      %263 = vmatpush1.msra.mxu0 %v227
      %264 = vmatprep.subr.mxu0 0.0
      %265 = vmatpush1.msra.mxu0 %v226
      %266 = vmatprep.subr.mxu0 0.0
      %267 = vmatpush1.msra.mxu0 %v225
      %268 = vmatprep.subr.mxu0 0.0
      %269 = vmatpush1.msra.mxu0 %v224
      %270 = vmatprep.subr.mxu0 0.0
      %271 = vmatpush1.msra.mxu0 %v223
      %272 = vmatprep.subr.mxu0 0.0
      %273 = vmatpush1.msra.mxu0 %v222
      %274 = vmatprep.subr.mxu0 0.0
      %275 = vmatpush1.msra.mxu0 %v221
      %276 = vmatprep.subr.mxu0 0.0
      %277 = vmatpush2.msra.mxu0 0.0
      %278 = vmatprep.subr.mxu0 0.0
      %279 = vmatpush2.msra.mxu0 0.0
      %280 = vmatprep.subr.mxu0 0.0
      %281 = vmatpush2.msra.mxu0 0.0
      %282 = vmatprep.subr.mxu0 0.0
      %283 = vmatpush2.msra.mxu0 0.0
      %284 = vmatprep.subr.mxu0 0.0
      %285 = vmatpush2.msra.mxu0 0.0
      %286 = vmatprep.subr.mxu0 0.0
      %287 = vmatpush2.msra.mxu0 0.0
      %288 = vmatprep.subr.mxu0 0.0
      %289 = vmatpush2.msra.mxu0 0.0
      %290 = vmatprep.subr.mxu0 0.0
      %291 = vmatpush2.msra.mxu0 0.0
      %292 = vmatprep.subr.mxu0 0.0
      %293 = vmatpush2.msra.mxu0 0.0
      %294 = vmatprep.subr.mxu0 0.0
      %295 = vmatpush2.msra.mxu0 0.0
      %296 = vmatprep.subr.mxu0 0.0
      %297 = vmatpush2.msra.mxu0 0.0
      %298 = vmatprep.subr.mxu0 0.0
      %299 = vmatpush2.msra.mxu0 0.0
      %300 = vmatprep.subr.mxu0 0.0
      %301 = vmatpush2.msra.mxu0 0.0
      %302 = vmatprep.subr.mxu0 0.0
      %303 = vmatpush2.msra.mxu0 0.0
      %304 = vmatprep.subr.mxu0 0.0
      %305 = vmatpush2.msra.mxu0 0.0
      %306 = vmatprep.subr.mxu0 0.0
      %307 = vmatpush2.msra.mxu0 0.0
      %308 = vmatprep.mubr.f32.mxu0 0.0
      %309 = vmatmul.mubr.f32.gmra.mxu0 %v220
      %v310 = vpop.f32.mrf.mxu0
      %v311 = vadd.f32 %v242, %v310
      %v312 = vpop.f32.mrf.mxu0
      %313 = vdwg.mxu0
      %v314 = vmax.f32 %v311, 0.0
      %v315 = vld [vmem:[%s3] sm:$0xff]
      %v316 = vld [vmem:[%s3 + $0x8] sm:$0xff]
      %v317 = vld [vmem:[%s3 + $0x10] sm:$0xff]
      %v318 = vld [vmem:[%s3 + $0x18] sm:$0xff]
      %v319 = vld [vmem:[%s3 + $0x20] sm:$0xff]
      %v320 = vld [vmem:[%s3 + $0x28] sm:$0xff]
      %v321 = vld [vmem:[%s3 + $0x30] sm:$0xff]
      %v322 = vld [vmem:[%s3 + $0x38] sm:$0xff]
      %v323 = vld [vmem:[%s3 + $0x40] sm:$0xff]
      %v324 = vld [vmem:[%s3 + $0x48] sm:$0xff]
      %v325 = vld [vmem:[%s3 + $0x50] sm:$0xff]
      %v326 = vld [vmem:[%s3 + $0x58] sm:$0xff]
      %v327 = vld [vmem:[%s3 + $0x60] sm:$0xff]
      %v328 = vld [vmem:[%s3 + $0x68] sm:$0xff]
      %v329 = vld [vmem:[%s3 + $0x70] sm:$0xff]
      %v330 = vld [vmem:[%s3 + $0x78] sm:$0xff]
      %v331 = vld [vmem:[%s4] sm:$0x1]
      %v333 = vlaneseq
      %v334 = vshrl.u32 %v333, 7
      %v335 = vsub.s32 0, %v334
      %v336 = vrot.slane %v331, %v335
      %338 = vmatprep.subr.mxu0 0.0
      %339 = vmatpush1.msra.mxu0 %v330
      %340 = vmatprep.subr.mxu0 0.0
      %341 = vmatpush1.msra.mxu0 %v329
      %342 = vmatprep.subr.mxu0 0.0
      %343 = vmatpush1.msra.mxu0 %v328
      %344 = vmatprep.subr.mxu0 0.0
      %345 = vmatpush1.msra.mxu0 %v327
      %346 = vmatprep.subr.mxu0 0.0
      %347 = vmatpush1.msra.mxu0 %v326
      %348 = vmatprep.subr.mxu0 0.0
      %349 = vmatpush1.msra.mxu0 %v325
      %350 = vmatprep.subr.mxu0 0.0
      %351 = vmatpush1.msra.mxu0 %v324
      %352 = vmatprep.subr.mxu0 0.0
      %353 = vmatpush1.msra.mxu0 %v323
      %354 = vmatprep.subr.mxu0 0.0
      %355 = vmatpush1.msra.mxu0 %v322
      %356 = vmatprep.subr.mxu0 0.0
      %357 = vmatpush1.msra.mxu0 %v321
      %358 = vmatprep.subr.mxu0 0.0
      %359 = vmatpush1.msra.mxu0 %v320
      %360 = vmatprep.subr.mxu0 0.0
      %361 = vmatpush1.msra.mxu0 %v319
      %362 = vmatprep.subr.mxu0 0.0
      %363 = vmatpush1.msra.mxu0 %v318
      %364 = vmatprep.subr.mxu0 0.0
      %365 = vmatpush1.msra.mxu0 %v317
      %366 = vmatprep.subr.mxu0 0.0
      %367 = vmatpush1.msra.mxu0 %v316
      %368 = vmatprep.subr.mxu0 0.0
      %369 = vmatpush1.msra.mxu0 %v315
      %370 = vmatprep.subr.mxu0 0.0
      %371 = vmatpush2.msra.mxu0 0.0
      %372 = vmatprep.subr.mxu0 0.0
      %373 = vmatpush2.msra.mxu0 0.0
      %374 = vmatprep.subr.mxu0 0.0
      %375 = vmatpush2.msra.mxu0 0.0
      %376 = vmatprep.subr.mxu0 0.0
      %377 = vmatpush2.msra.mxu0 0.0
      %378 = vmatprep.subr.mxu0 0.0
      %379 = vmatpush2.msra.mxu0 0.0
      %380 = vmatprep.subr.mxu0 0.0
      %381 = vmatpush2.msra.mxu0 0.0
      %382 = vmatprep.subr.mxu0 0.0
      %383 = vmatpush2.msra.mxu0 0.0
      %384 = vmatprep.subr.mxu0 0.0
      %385 = vmatpush2.msra.mxu0 0.0
      %386 = vmatprep.subr.mxu0 0.0
      %387 = vmatpush2.msra.mxu0 0.0
      %388 = vmatprep.subr.mxu0 0.0
      %389 = vmatpush2.msra.mxu0 0.0
      %390 = vmatprep.subr.mxu0 0.0
      %391 = vmatpush2.msra.mxu0 0.0
      %392 = vmatprep.subr.mxu0 0.0
      %393 = vmatpush2.msra.mxu0 0.0
      %394 = vmatprep.subr.mxu0 0.0
      %395 = vmatpush2.msra.mxu0 0.0
      %396 = vmatprep.subr.mxu0 0.0
      %397 = vmatpush2.msra.mxu0 0.0
      %398 = vmatprep.subr.mxu0 0.0
      %399 = vmatpush2.msra.mxu0 0.0
      %400 = vmatprep.subr.mxu0 0.0
      %401 = vmatpush2.msra.mxu0 0.0
      %402 = vmatprep.mubr.f32.mxu0 0.0
      %403 = vmatmul.mubr.f32.gmra.mxu0 %v314
      %v404 = vpop.f32.mrf.mxu0
      %v405 = vadd.f32 %v336, %v404
      %v406 = vpop.f32.mrf.mxu0
      %407 = vdwg.mxu0
      %408 = vst [vmem:[%s219] sm:$0xff] %v405
      %p409 = scmp.lt.s32.totalorder %s16, 2
      %s410 = scalar_select %p409, %s16, 2
      %s411 = smul.addr %s410, 8
      %s412 = scalar_lea.vmem %s5, %s411
      // Predicated region
      $region41: #{conditioner2_forward.1} parent=39 // pred_check
        %p413 = pneg %p144
      $region42: #{conditioner2_forward.1} parent=39 // pred_check_branch
        %415 = sbr.rel (%p413) target = $region44
      $region43: #{conditioner2_forward.1} parent=39 // pred_region
        _
      $region44: #{conditioner2_forward.1} parent=39 // pred_fallthru
        _
    $region40: #{conditioner2_forward.1} parent=5 // pred_fallthru
      _
    %p416 = scmp.le.s32.totalorder 2, %s11
    // Predicated region
    $region45: #{conditioner2_forward.1} parent=5 // pred_check
      %p417 = pneg %p416
    $region46: #{conditioner2_forward.1} parent=5 // pred_check_branch
      %419 = sbr.rel (%p417) target = $region48
    $region47: #{conditioner2_forward.1} parent=5 // pred_region
      %s420 = ssub.s32 %s11, 2
      // Predicated region
      $region49: #{conditioner2_forward.1} parent=47 // pred_check
        %p421 = pneg %p150
      $region50: #{conditioner2_forward.1} parent=47 // pred_check_branch
        %423 = sbr.rel (%p421) target = $region52
      $region51: #{conditioner2_forward.1} parent=47 // pred_region
        %p424 = scmp.lt.s32.totalorder %s17, 2
        %s425 = scalar_select %p424, %s17, 2
        %s426 = smul.addr %s425, 8
        %s427 = scalar_lea.vmem %s5, %s426
      $region52: #{conditioner2_forward.1} parent=47 // pred_fallthru
        _
    $region48: #{conditioner2_forward.1} parent=5 // pred_fallthru
      _
  $region6: #{conditioner2_forward.1} parent=0 // loop_footer
    %s15 = sadd.s32 1, %s11
  $region7: #{conditioner2_forward.1} parent=0 // loop_footer_branch
    %10 = sbr.rel target = $region3
  $region8: #{conditioner2_forward.1} parent=0 // loop_exit
    _

</llo_original>
